<compile_context>
chip_gen: v7x
topology: tpu7x:2x2x1
jax: 0.10.0
libtpu: 0.0.40
codegen_flags: <defaults>
</compile_context>

<pallas_src>
import functools

import jax
import jax.numpy as jnp
from jax.experimental import pallas as pl
from jax.experimental.pallas import tpu as pltpu


LEAKY_SLOPE = 0.01            # nn.LeakyReLU() default negative_slope
LANES = 128                   # lane width of a vreg
VMEM_DATA_BUDGET = 20 << 20   # conservative data budget (fits every gen's scoped VMEM)
VMEM_LIMIT_BYTES = 32 << 20   # explicit scoped-VMEM limit (safe on v5e/v6e/v7x)


def _round_up(x, m):
    return (x + m - 1) // m * m


def _block_diag(a, b):
    r1, c1 = a.shape
    r2, c2 = b.shape
    top = jnp.concatenate([a, jnp.zeros((r1, c2), a.dtype)], axis=1)
    bot = jnp.concatenate([jnp.zeros((r2, c1), b.dtype), b], axis=1)
    return jnp.concatenate([top, bot], axis=0)


def _pack_params(critic_params, actor_params):
    """Fuse actor/critic per layer and pack into one weight + one bias buffer.

    Weights are stored transposed vs. PyTorch, i.e. (in_features, out_features).
    Actor columns come FIRST in every fused block so the actor head lands in
    lanes [0, num_actions) and the critic value in lane num_actions.

    Every fused block is zero-padded to full width:
      rows    -> previous layer's padded width (input: round_up(in_features, 8))
      columns -> pack_cols = round_up(max fused width, 128)
    so the kernel only ever sees full (K_pad, pack_cols) operands.
    """
    n_layers = len(actor_params)            # hidden layers + head
    in_features = actor_params[0][0].shape[0]
    in_pad = _round_up(in_features, 8)

    fused = []
    # Hidden layer 0: shared input x -> concatenate along the output dim.
    wa, ba = actor_params[0]
    wc, bc = critic_params[0]
    fused.append((jnp.concatenate([wa, wc], axis=1),
                  jnp.concatenate([ba, bc], axis=1)))
    # Deeper hidden layers + the two heads: block-diagonal (actor block first).
    for i in range(1, n_layers):
        wa, ba = actor_params[i]
        wc, bc = critic_params[i]
        fused.append((_block_diag(wa, wc), jnp.concatenate([ba, bc], axis=1)))

    pack_cols = _round_up(max(w.shape[1] for (w, _) in fused), LANES)

    w_blocks, b_blocks, row_offsets, k_dims = [], [], [], []
    off = 0
    prev_out_pad = in_pad                     # padded width of the layer input
    for (w, b) in fused:
        k, n = w.shape
        k_pad = prev_out_pad                  # zero rows for padded input lanes
        w_blocks.append(jnp.pad(w, ((0, k_pad - k), (0, pack_cols - n))))
        b_blocks.append(jnp.pad(b, ((0, 0), (0, pack_cols - n))))
        row_offsets.append(off)
        k_dims.append(k_pad)
        off += k_pad
        prev_out_pad = pack_cols              # every activation is (TB, pack_cols)

    w_pack = jnp.concatenate(w_blocks, axis=0)        # (R_total, pack_cols)
    b_pack = jnp.concatenate(b_blocks, axis=0)        # (n_layers, pack_cols)
    return w_pack, b_pack, tuple(row_offsets), tuple(k_dims), pack_cols, in_pad


def _actor_critic_kernel(row_offsets, k_dims, num_actions,
                         x_ref, w_ref, b_ref, probs_ref, value_ref):
    """Fused actor+critic MLP forward for one batch tile.

    Head layout (lane-dense intermediate, width = pack_cols):
      lanes 0..num_actions-1 : actor logits -> softmax -> probs_ref
      lane  num_actions      : critic value -> value_ref
      remaining lanes        : 0 (zero weights & biases)
    """
    n_layers = len(k_dims)
    h = x_ref[...]                               # (TB, in_pad)
    head = None
    for i in range(n_layers):
        off, k = row_offsets[i], k_dims[i]
        w = w_ref[off:off + k, :]                # static full-width (K_pad, 128) slice
        b = b_ref[i:i + 1, :]                    # (1, 128)
        z = jnp.dot(h, w, preferred_element_type=jnp.float32) + b
        if i < n_layers - 1:
            # LeakyReLU; Dropout(p) is identity at inference time.
            h = jnp.maximum(z, LEAKY_SLOPE * z)
        else:
            head = z                             # (TB, 128)

    # Softmax over the action lanes only (nn.Softmax() on 2-D input -> dim=1).
    lane = jax.lax.broadcasted_iota(jnp.int32, head.shape, 1)
    is_action = lane < num_actions
    logits = jnp.where(is_action, head, jnp.float32(-1e30))
    m = jnp.max(logits, axis=-1, keepdims=True)
    e = jnp.where(is_action, jnp.exp(logits - m), jnp.float32(0.0))
    denom = jnp.sum(e, axis=-1, keepdims=True)
    # Exact reciprocal (approx=False) so probs sum to 1 to f32 precision.
    probs = e * pl.reciprocal(denom)

    probs_ref[...] = probs[:, :num_actions]
    value_ref[...] = head[:, num_actions:num_actions + 1]


def _pick_batch_tile(batch, in_pad, lanes, out_cols, w_bytes, block_batch):
    """Bytes-aware batch tile; guarantees >=2 grid steps for larger batches."""
    # Double-buffered x + output blocks per row, plus ~3 live (TB, lanes) f32
    # temporaries (activations / softmax intermediates).
    per_row = 2 * 4 * (in_pad + out_cols) + 3 * 4 * lanes
    budget = max(VMEM_DATA_BUDGET - 2 * w_bytes, 1 << 20)
    tb_budget = max(8, (budget // per_row) // 8 * 8)

    b8 = _round_up(batch, 8)
    tb = min(block_batch, tb_budget, b8)
    if batch > 64 and tb >= b8:
        # Split into (at least) 2 grid steps so v7x's second TensorCore gets work.
        tb = min(tb, _round_up((batch + 1) // 2, 8))
    return max(8, tb)


def actor_critic_forward(x, critic_params, actor_params, *, block_batch=2048):
    """Run the ActorCritic forward pass with a single fused Pallas kernel.

    Args:
      x: (B, input_size) float32, input_size = window_size * num_features.
      critic_params / actor_params: list of (W, b) with W (in, out), b (1, out);
        the last pair is the output head. Both lists share hidden sizes.
    Returns:
      (probs, value): probs (B, num_actions), value (B, 1).
    """
    batch, input_size = x.shape
    num_actions = actor_params[-1][0].shape[1]

    w_pack, b_pack, row_offsets, k_dims, lanes, in_pad = _pack_params(
        critic_params, actor_params)
    w_bytes = w_pack.size * 4 + b_pack.size * 4

    tb = _pick_batch_tile(batch, in_pad, lanes, num_actions + 1, w_bytes,
                          block_batch)
    b_pad = _round_up(_round_up(batch, 8), tb)
    grid = (b_pad // tb,)

    # Pad x to (b_pad, in_pad): batch to a tile multiple, features to 8-aligned
    # (matches the zero-padded K rows of the first fused weight block).
    if b_pad != batch or in_pad != input_size:
        x = jnp.pad(x, ((0, b_pad - batch), (0, in_pad - input_size)))

    kernel = functools.partial(_actor_critic_kernel, row_offsets, k_dims,
                               num_actions)
    probs_pad, value_pad = pl.pallas_call(
        kernel,
        out_shape=(jax.ShapeDtypeStruct((b_pad, num_actions), jnp.float32),
                   jax.ShapeDtypeStruct((b_pad, 1), jnp.float32)),
        grid=grid,
        in_specs=[
            pl.BlockSpec((tb, in_pad), lambda i: (i, 0)),       # x: tiled over batch
            pl.BlockSpec(w_pack.shape, lambda i: (0, 0)),       # weights: VMEM-resident
            pl.BlockSpec(b_pack.shape, lambda i: (0, 0)),       # biases : VMEM-resident
        ],
        out_specs=[
            pl.BlockSpec((tb, num_actions), lambda i: (i, 0)),  # probs (narrow, contiguous)
            pl.BlockSpec((tb, 1), lambda i: (i, 0)),            # value (narrow, contiguous)
        ],
        compiler_params=pltpu.CompilerParams(
            dimension_semantics=("parallel",),                  # shards over 2 TCs on v7x
            vmem_limit_bytes=VMEM_LIMIT_BYTES),
    )(x, w_pack, b_pack)

    return probs_pad[:batch], value_pad[:batch]


def _init_linear(key, fan_in, fan_out):
    """Deterministic PyTorch-style (Kaiming-uniform) init, stored as (in, out)."""
    kw, kb = jax.random.split(key)
    bound = 1.0 / jnp.sqrt(jnp.float32(fan_in))
    w = jax.random.uniform(kw, (fan_in, fan_out), jnp.float32, -bound, bound)
    b = jax.random.uniform(kb, (1, fan_out), jnp.float32, -bound, bound)
    return w, b


def build_params(key, input_size, hidden_sizes, num_actions):
    keys = jax.random.split(key, 2 * (len(hidden_sizes) + 1))
    k_iter = iter(keys)

    critic = []
    prev = input_size
    for h in hidden_sizes:
        critic.append(_init_linear(next(k_iter), prev, h))
        prev = h
    critic.append(_init_linear(next(k_iter), prev, 1))

    actor = []
    prev = input_size
    for h in hidden_sizes:
        actor.append(_init_linear(next(k_iter), prev, h))
        prev = h
    actor.append(_init_linear(next(k_iter), prev, num_actions))
    return critic, actor


if __name__ == "__main__":
    # Module hyper-parameters (small, consistent with __init__ kwargs).
    window_size = 8
    num_features = 4
    hidden_sizes = [32, 32]
    num_actions = 4
    batch = 8
    input_size = window_size * num_features

    key = jax.random.PRNGKey(0)
    k_x, k_params = jax.random.split(key)
    x = jax.random.normal(k_x, (batch, input_size), jnp.float32)
    critic_params, actor_params = build_params(
        k_params, input_size, hidden_sizes, num_actions)

    probs, value = actor_critic_forward(x, critic_params, actor_params)
    jax.block_until_ready((probs, value))

    # Plain-JAX reference (same math as the PyTorch module in eval mode).
    def ref_mlp(x, params, softmax):
        h = x
        for (w, b) in params[:-1]:
            z = jnp.dot(h, w, precision=jax.lax.Precision.HIGHEST) + b
            h = jnp.where(z > 0, z, LEAKY_SLOPE * z)
        w, b = params[-1]
        out = jnp.dot(h, w, precision=jax.lax.Precision.HIGHEST) + b
        if softmax:
            out = jax.nn.softmax(out, axis=-1)
        return out

    probs_ref = ref_mlp(x, actor_params, softmax=True)
    value_ref = ref_mlp(x, critic_params, softmax=False)

    # Tolerances leave headroom for MXU f32-via-bf16 pass precision on real TPUs.
    assert jnp.allclose(value, value_ref, atol=5e-3, rtol=5e-3), \
        float(jnp.max(jnp.abs(value - value_ref)))
    assert jnp.allclose(probs, probs_ref, atol=2e-3, rtol=2e-3), \
        float(jnp.max(jnp.abs(probs - probs_ref)))
    # Exact reciprocal in the kernel -> probs sum to 1 to f32 precision.
    assert jnp.allclose(jnp.sum(probs, axis=-1), 1.0, atol=1e-3)
    assert probs.shape == (batch, num_actions) and value.shape == (batch, 1)

    print("KERNEL_OK")
</pallas_src>

<mosaic_0001>
module attributes {stable_mosaic.version = 11 : i64} {
  func.func @_actor_critic_kernel(%arg0: i32, %arg1: memref<8x32xf32, #tpu.memory_space<vmem>>, %arg2: memref<288x128xf32, #tpu.memory_space<vmem>>, %arg3: memref<3x128xf32, #tpu.memory_space<vmem>>, %arg4: memref<8x4xf32, #tpu.memory_space<vmem>>, %arg5: memref<8x1xf32, #tpu.memory_space<vmem>>) attributes {dimension_semantics = [#tpu.dimension_semantics<parallel>], iteration_bounds = array<i64: 1>, scalar_prefetch = 0 : i64, scratch_operands = 0 : i64, tpu.core_type = #tpu.core_type<tc>, window_params = [{transform_indices = @transform_0, window_bounds = array<i64: 8, 32>}, {pipeline_mode = #tpu.pipeline_mode<synchronous>, transform_indices = @transform_1, window_bounds = array<i64: 288, 128>}, {pipeline_mode = #tpu.pipeline_mode<synchronous>, transform_indices = @transform_2, window_bounds = array<i64: 3, 128>}, {transform_indices = @transform_3, window_bounds = array<i64: 8, 4>}, {transform_indices = @transform_4, window_bounds = array<i64: 8, 1>}]} {
    %c0 = arith.constant 0 : index
    %c0_0 = arith.constant 0 : index
    %0 = vector.load %arg1[%c0, %c0_0] : memref<8x32xf32, #tpu.memory_space<vmem>>, vector<8x32xf32>
    %c0_1 = arith.constant 0 : index
    %c0_2 = arith.constant 0 : index
    %1 = vector.load %arg2[%c0_1, %c0_2] : memref<288x128xf32, #tpu.memory_space<vmem>>, vector<32x128xf32>
    %c0_3 = arith.constant 0 : index
    %c0_4 = arith.constant 0 : index
    %2 = vector.load %arg3[%c0_3, %c0_4] : memref<3x128xf32, #tpu.memory_space<vmem>>, vector<1x128xf32>
    %cst = arith.constant dense<0.000000e+00> : vector<8x128xf32>
    %3 = tpu.matmul %0, %1, %cst {dimension_numbers = #tpu.dot_dimension_numbers<[1], [0], [0], [1], [0, 0, 1, 1], [], []>} : vector<8x32xf32>, vector<32x128xf32>, vector<8x128xf32> -> vector<8x128xf32>
    %4 = vector.broadcast %2 : vector<1x128xf32> to vector<8x128xf32>
    %5 = arith.addf %3, %4 : vector<8x128xf32>
    %cst_5 = arith.constant 0.00999999977 : f32
    %6 = vector.broadcast %cst_5 : f32 to vector<8x128xf32>
    %7 = arith.mulf %6, %5 : vector<8x128xf32>
    %8 = arith.maximumf %5, %7 : vector<8x128xf32>
    %c32 = arith.constant 32 : index
    %c0_6 = arith.constant 0 : index
    %9 = vector.load %arg2[%c32, %c0_6] : memref<288x128xf32, #tpu.memory_space<vmem>>, vector<128x128xf32>
    %c1 = arith.constant 1 : index
    %c0_7 = arith.constant 0 : index
    %10 = vector.load %arg3[%c1, %c0_7] : memref<3x128xf32, #tpu.memory_space<vmem>>, vector<1x128xf32>
    %cst_8 = arith.constant dense<0.000000e+00> : vector<8x128xf32>
    %11 = tpu.matmul %8, %9, %cst_8 {dimension_numbers = #tpu.dot_dimension_numbers<[1], [0], [0], [1], [0, 0, 1, 1], [], []>} : vector<8x128xf32>, vector<128x128xf32>, vector<8x128xf32> -> vector<8x128xf32>
    %12 = vector.broadcast %10 : vector<1x128xf32> to vector<8x128xf32>
    %13 = arith.addf %11, %12 : vector<8x128xf32>
    %cst_9 = arith.constant 0.00999999977 : f32
    %14 = vector.broadcast %cst_9 : f32 to vector<8x128xf32>
    %15 = arith.mulf %14, %13 : vector<8x128xf32>
    %16 = arith.maximumf %13, %15 : vector<8x128xf32>
    %c160 = arith.constant 160 : index
    %c0_10 = arith.constant 0 : index
    %17 = vector.load %arg2[%c160, %c0_10] : memref<288x128xf32, #tpu.memory_space<vmem>>, vector<128x128xf32>
    %c2 = arith.constant 2 : index
    %c0_11 = arith.constant 0 : index
    %18 = vector.load %arg3[%c2, %c0_11] : memref<3x128xf32, #tpu.memory_space<vmem>>, vector<1x128xf32>
    %cst_12 = arith.constant dense<0.000000e+00> : vector<8x128xf32>
    %19 = tpu.matmul %16, %17, %cst_12 {dimension_numbers = #tpu.dot_dimension_numbers<[1], [0], [0], [1], [0, 0, 1, 1], [], []>} : vector<8x128xf32>, vector<128x128xf32>, vector<8x128xf32> -> vector<8x128xf32>
    %20 = vector.broadcast %18 : vector<1x128xf32> to vector<8x128xf32>
    %21 = arith.addf %19, %20 : vector<8x128xf32>
    %22 = tpu.iota {dimensions = array<i32: 1>} : vector<8x128xi32>
    %c4_i32 = arith.constant 4 : i32
    %23 = vector.broadcast %c4_i32 : i32 to vector<8x128xi32>
    %24 = arith.cmpi slt, %22, %23 : vector<8x128xi32>
    %cst_13 = arith.constant -1.000000e+30 : f32
    %25 = vector.broadcast %cst_13 : f32 to vector<8x128xf32>
    %26 = arith.select %24, %21, %25 : vector<8x128xi1>, vector<8x128xf32>
    %cst_14 = arith.constant dense<0xFF800000> : vector<8xf32>
    %27 = vector.multi_reduction <maximumf>, %26, %cst_14 [1] : vector<8x128xf32> to vector<8xf32>
    %28 = vector.shape_cast %27 : vector<8xf32> to vector<8x1xf32>
    %29 = vector.broadcast %28 : vector<8x1xf32> to vector<8x128xf32>
    %30 = arith.subf %26, %29 : vector<8x128xf32>
    %31 = math.exp %30 : vector<8x128xf32>
    %cst_15 = arith.constant 0.000000e+00 : f32
    %32 = vector.broadcast %cst_15 : f32 to vector<8x128xf32>
    %33 = arith.select %24, %31, %32 : vector<8x128xi1>, vector<8x128xf32>
    %cst_16 = arith.constant dense<0.000000e+00> : vector<8xf32>
    %34 = vector.multi_reduction <add>, %33, %cst_16 [1] : vector<8x128xf32> to vector<8xf32>
    %35 = vector.shape_cast %34 : vector<8xf32> to vector<8x1xf32>
    %36 = tpu.reciprocal %35 : vector<8x1xf32> -> vector<8x1xf32>
    %37 = vector.broadcast %36 : vector<8x1xf32> to vector<8x128xf32>
    %38 = arith.mulf %33, %37 : vector<8x128xf32>
    %39 = vector.extract_strided_slice %38 {offsets = [0, 0], sizes = [8, 4], strides = [1, 1]} : vector<8x128xf32> to vector<8x4xf32>
    %c0_17 = arith.constant 0 : index
    %c0_18 = arith.constant 0 : index
    %40 = vector.load %arg4[%c0_17, %c0_18] : memref<8x4xf32, #tpu.memory_space<vmem>>, vector<8x4xf32>
    tpu.vector_store %arg4[%c0_17, %c0_18], %39 {strides = array<i32>} : memref<8x4xf32, #tpu.memory_space<vmem>>, vector<8x4xf32>,
    %41 = vector.extract_strided_slice %21 {offsets = [0, 4], sizes = [8, 1], strides = [1, 1]} : vector<8x128xf32> to vector<8x1xf32>
    %c0_19 = arith.constant 0 : index
    %c0_20 = arith.constant 0 : index
    %42 = vector.load %arg5[%c0_19, %c0_20] : memref<8x1xf32, #tpu.memory_space<vmem>>, vector<8x1xf32>
    tpu.vector_store %arg5[%c0_19, %c0_20], %41 {strides = array<i32>} : memref<8x1xf32, #tpu.memory_space<vmem>>, vector<8x1xf32>,
    return
  }
  func.func @transform_0(%arg0: i32) -> (i32, i32) {
    %c0_i32 = arith.constant 0 : i32
    %c0_i32_0 = arith.constant 0 : i32
    return %arg0, %c0_i32 : i32, i32
  }
  func.func @transform_1(%arg0: i32) -> (i32, i32) {
    %c0_i32 = arith.constant 0 : i32
    %c0_i32_0 = arith.constant 0 : i32
    %c0_i32_1 = arith.constant 0 : i32
    return %c0_i32, %c0_i32_0 : i32, i32
  }
  func.func @transform_2(%arg0: i32) -> (i32, i32) {
    %c0_i32 = arith.constant 0 : i32
    %c0_i32_0 = arith.constant 0 : i32
    %c0_i32_1 = arith.constant 0 : i32
    return %c0_i32, %c0_i32_0 : i32, i32
  }
  func.func @transform_3(%arg0: i32) -> (i32, i32) {
    %c0_i32 = arith.constant 0 : i32
    %c0_i32_0 = arith.constant 0 : i32
    return %arg0, %c0_i32 : i32, i32
  }
  func.func @transform_4(%arg0: i32) -> (i32, i32) {
    %c0_i32 = arith.constant 0 : i32
    %c0_i32_0 = arith.constant 0 : i32
    return %arg0, %c0_i32 : i32, i32
  }
}

</mosaic_0001>

<llo_original>
// kernel: tpu_custom_call.1
$region0: #{tpu_custom_call.1}
  #allocation0 [shape = 'u32[]', space=smem, size = 0x4, offset = 0x4, fixed_abs, tag = 'smem constant byte address 0x4 - core index']
  #allocation1 [shape = 'u32[144,128]{1,0:T(1,128)}', space=vmem, size = 0x12000, scoped, tag = 'internal scratch']
  %s0 = inlined_call_operand.hbm [shape: f32[8,32], index: 0, kind: input, shape index: {}]
  %s1 = inlined_call_operand.hbm [shape: f32[288,128], index: 1, kind: input, shape index: {}]
  %s2 = inlined_call_operand.vmem [shape: f32[3,128], index: 2, kind: input, shape index: {}]
  %s3 = inlined_call_operand.vmem [shape: f32[8,4], index: 3, kind: output, shape index: {0}]
  %s4 = inlined_call_operand.vmem [shape: f32[8,1], index: 4, kind: output, shape index: {1}]
  %5 = xla_tuple %s3, %s4
  %s6 = sld [smem:[#allocation0]]
  $region38: #{tpu_custom_call.1} parent=0
    _
  %s8 = ssub.s32 1, %s6
  %s9 = scalar_select 0, %s8, %s6
  $region1: #{tpu_custom_call.1} parent=0
    #allocation2 [shape = 'u8[4096]{0}', space=vmem, size = 0x1000, scoped, tag = 'input window, operand 0, single buffered']
    #allocation3 [shape = 's32[1]{0}', space=sflag, size = 0x4, scoped, tag = 'scoped memory for tpu_custom_call.1']
    #allocation4 [shape = 'u8[147456]{0}', space=vmem, size = 0x24000, scoped, tag = 'input window, operand 1, single buffered']
    #allocation5 [shape = 's32[1]{0}', space=sflag, size = 0x4, scoped, tag = 'scoped memory for tpu_custom_call.1']
    %10 = vsyncpa [#allocation3], 0
    %11 = vsyncpa [#allocation5], 0
    // Predicated region
    $region2: #{tpu_custom_call.1} parent=1 // pred_check
      _
    $region3: #{tpu_custom_call.1} parent=1 // pred_check_branch
      %13 = sbr.rel (0) target = $region5
    $region4: #{tpu_custom_call.1} parent=1 // pred_region
      %s15 = ssub.s32 128, 128
      %16 = vsyncadd [#allocation3], %s15
      %s18 = sshll.u32 [#allocation2], 4
      %s19 = int_to_ptr.vmem [resolvable:$true] %s18
      %21 = dma.hbm_to_vmem [thread:$0]  %s0, 128, %s19, [#allocation3]
    $region5: #{tpu_custom_call.1} parent=1 // pred_fallthru
      _
    // Predicated region
    $region6: #{tpu_custom_call.1} parent=1 // pred_check
      _
    $region7: #{tpu_custom_call.1} parent=1 // pred_check_branch
      %23 = sbr.rel (0) target = $region9
    $region8: #{tpu_custom_call.1} parent=1 // pred_region
      %s25 = ssub.s32 4608, 4608
      %26 = vsyncadd [#allocation5], %s25
      %s27 = sshll.u32 [#allocation4], 4
      %s28 = int_to_ptr.vmem [resolvable:$true] %s27
      %33 = dma.hbm_to_vmem [thread:$0]  %s1, 4608, %s28, [#allocation5], 128, 128, 8
    $region9: #{tpu_custom_call.1} parent=1 // pred_fallthru
      _
    // Predicated region
    $region10: #{tpu_custom_call.1} parent=1 // pred_check
      _
    $region11: #{tpu_custom_call.1} parent=1 // pred_check_branch
      %35 = sbr.rel (0) target = $region13
    $region12: #{tpu_custom_call.1} parent=1 // pred_region
      _
    $region13: #{tpu_custom_call.1} parent=1 // pred_fallthru
      _
    // Predicated region
    $region14: #{tpu_custom_call.1} parent=1 // pred_check
      _
    $region15: #{tpu_custom_call.1} parent=1 // pred_check_branch
      %37 = sbr.rel (0) target = $region17
    $region16: #{tpu_custom_call.1} parent=1 // pred_region
      %38 = dma.done [#allocation3], 128
    $region17: #{tpu_custom_call.1} parent=1 // pred_fallthru
      _
    // Predicated region
    $region18: #{tpu_custom_call.1} parent=1 // pred_check
      _
    $region19: #{tpu_custom_call.1} parent=1 // pred_check_branch
      %40 = sbr.rel (0) target = $region21
    $region20: #{tpu_custom_call.1} parent=1 // pred_region
      %41 = dma.done [#allocation5], 4608
    $region21: #{tpu_custom_call.1} parent=1 // pred_fallthru
      _
    %v42 = vld [vmem:[#allocation2] sm:$0xff]
    %v43 = vld [vmem:[#allocation4] sm:$0xff]
    %v44 = vld [vmem:[#allocation4 + $0x8] sm:$0xff]
    %v45 = vld [vmem:[#allocation4 + $0x10] sm:$0xff]
    %v46 = vld [vmem:[#allocation4 + $0x18] sm:$0xff]
    %v47 = vld [vmem:[%s2] sm:$0x1]
    %v48 = vlaneseq
    %v49 = vshrl.u32 %v48, 7
    %v50 = vsub.s32 0, %v49
    %v51 = vrot.slane %v47, %v50
    %vm52 = vcmask 261120
    %v54 = vsel %vm52, %v42, 0
    %56 = vmatprep.subr.mxu0 0.0
    %57 = vmatpush1.msra.mxu0 %v43
    %58 = vmatprep.subr.mxu0 0.0
    %59 = vmatpush1.msra.mxu0 %v44
    %60 = vmatprep.subr.mxu0 0.0
    %61 = vmatpush1.msra.mxu0 %v45
    %62 = vmatprep.subr.mxu0 0.0
    %63 = vmatpush1.msra.mxu0 %v46
    %64 = vmatprep.subr.mxu0 0.0
    %65 = vmatpush1.msra.mxu0 0.0
    %66 = vmatprep.subr.mxu0 0.0
    %67 = vmatpush1.msra.mxu0 0.0
    %68 = vmatprep.subr.mxu0 0.0
    %69 = vmatpush1.msra.mxu0 0.0
    %70 = vmatprep.subr.mxu0 0.0
    %71 = vmatpush1.msra.mxu0 0.0
    %72 = vmatprep.subr.mxu0 0.0
    %73 = vmatpush1.msra.mxu0 0.0
    %74 = vmatprep.subr.mxu0 0.0
    %75 = vmatpush1.msra.mxu0 0.0
    %76 = vmatprep.subr.mxu0 0.0
    %77 = vmatpush1.msra.mxu0 0.0
    %78 = vmatprep.subr.mxu0 0.0
    %79 = vmatpush1.msra.mxu0 0.0
    %80 = vmatprep.subr.mxu0 0.0
    %81 = vmatpush1.msra.mxu0 0.0
    %82 = vmatprep.subr.mxu0 0.0
    %83 = vmatpush1.msra.mxu0 0.0
    %84 = vmatprep.subr.mxu0 0.0
    %85 = vmatpush1.msra.mxu0 0.0
    %86 = vmatprep.subr.mxu0 0.0
    %87 = vmatpush1.msra.mxu0 0.0
    %88 = vmatprep.subr.mxu0 0.0
    %89 = vmatpush1.msra.mxu0 0.0
    %90 = vmatprep.subr.mxu0 0.0
    %91 = vmatpush1.msra.mxu0 0.0
    %92 = vmatprep.subr.mxu0 0.0
    %93 = vmatpush1.msra.mxu0 0.0
    %94 = vmatprep.subr.mxu0 0.0
    %95 = vmatpush1.msra.mxu0 0.0
    %96 = vmatprep.subr.mxu0 0.0
    %97 = vmatpush1.msra.mxu0 0.0
    %98 = vmatprep.subr.mxu0 0.0
    %99 = vmatpush1.msra.mxu0 0.0
    %100 = vmatprep.subr.mxu0 0.0
    %101 = vmatpush1.msra.mxu0 0.0
    %102 = vmatprep.subr.mxu0 0.0
    %103 = vmatpush1.msra.mxu0 0.0
    %104 = vmatprep.subr.mxu0 0.0
    %105 = vmatpush1.msra.mxu0 0.0
    %106 = vmatprep.subr.mxu0 0.0
    %107 = vmatpush1.msra.mxu0 0.0
    %108 = vmatprep.subr.mxu0 0.0
    %109 = vmatpush1.msra.mxu0 0.0
    %110 = vmatprep.subr.mxu0 0.0
    %111 = vmatpush1.msra.mxu0 0.0
    %112 = vmatprep.subr.mxu0 0.0
    %113 = vmatpush1.msra.mxu0 0.0
    %114 = vmatprep.subr.mxu0 0.0
    %115 = vmatpush1.msra.mxu0 0.0
    %116 = vmatprep.subr.mxu0 0.0
    %117 = vmatpush1.msra.mxu0 0.0
    %118 = vmatprep.subr.mxu0 0.0
    %119 = vmatpush1.msra.mxu0 0.0
    %120 = vmatprep.mubr.f32.mxu0 0.0
    %121 = vmatmul.mubr.f32.gmra.mrb[0].mxu0 %v54
    %v122 = vpop.f32.mrb[0].mxu0
    %v123 = vadd.f32 %v51, %v122
    %v124 = vpop.f32.mrb[0].mxu0
    %125 = vdwg.mxu0
    %v126 = vmul.f32 %v123, 0.01
    %v127 = vmax.f32 %v123, %v126
    %v128 = vld [vmem:[#allocation4 + $0x20] sm:$0xff]
    %v129 = vld [vmem:[#allocation4 + $0x28] sm:$0xff]
    %v130 = vld [vmem:[#allocation4 + $0x30] sm:$0xff]
    %v131 = vld [vmem:[#allocation4 + $0x38] sm:$0xff]
    %v132 = vld [vmem:[#allocation4 + $0x40] sm:$0xff]
    %v133 = vld [vmem:[#allocation4 + $0x48] sm:$0xff]
    %v134 = vld [vmem:[#allocation4 + $0x50] sm:$0xff]
    %v135 = vld [vmem:[#allocation4 + $0x58] sm:$0xff]
    %v136 = vld [vmem:[#allocation4 + $0x60] sm:$0xff]
    %v137 = vld [vmem:[#allocation4 + $0x68] sm:$0xff]
    %v138 = vld [vmem:[#allocation4 + $0x70] sm:$0xff]
    %v139 = vld [vmem:[#allocation4 + $0x78] sm:$0xff]
    %v140 = vld [vmem:[#allocation4 + $0x80] sm:$0xff]
    %v141 = vld [vmem:[#allocation4 + $0x88] sm:$0xff]
    %v142 = vld [vmem:[#allocation4 + $0x90] sm:$0xff]
    %v143 = vld [vmem:[#allocation4 + $0x98] sm:$0xff]
    %v144 = vld [vmem:[%s2 + $0x1] sm:$0x1]
    %v145 = vlaneseq
    %v146 = vshrl.u32 %v145, 7
    %v147 = vsub.s32 0, %v146
    %v148 = vrot.slane %v144, %v147
    %149 = vmatprep.subr.mxu0 0.0
    %150 = vmatpush1.msra.mxu0 %v128
    %151 = vmatprep.subr.mxu0 0.0
    %152 = vmatpush1.msra.mxu0 %v129
    %153 = vmatprep.subr.mxu0 0.0
    %154 = vmatpush1.msra.mxu0 %v130
    %155 = vmatprep.subr.mxu0 0.0
    %156 = vmatpush1.msra.mxu0 %v131
    %157 = vmatprep.subr.mxu0 0.0
    %158 = vmatpush1.msra.mxu0 %v132
    %159 = vmatprep.subr.mxu0 0.0
    %160 = vmatpush1.msra.mxu0 %v133
    %161 = vmatprep.subr.mxu0 0.0
    %162 = vmatpush1.msra.mxu0 %v134
    %163 = vmatprep.subr.mxu0 0.0
    %164 = vmatpush1.msra.mxu0 %v135
    %165 = vmatprep.subr.mxu0 0.0
    %166 = vmatpush1.msra.mxu0 %v136
    %167 = vmatprep.subr.mxu0 0.0
    %168 = vmatpush1.msra.mxu0 %v137
    %169 = vmatprep.subr.mxu0 0.0
    %170 = vmatpush1.msra.mxu0 %v138
    %171 = vmatprep.subr.mxu0 0.0
    %172 = vmatpush1.msra.mxu0 %v139
    %173 = vmatprep.subr.mxu0 0.0
    %174 = vmatpush1.msra.mxu0 %v140
    %175 = vmatprep.subr.mxu0 0.0
    %176 = vmatpush1.msra.mxu0 %v141
    %177 = vmatprep.subr.mxu0 0.0
    %178 = vmatpush1.msra.mxu0 %v142
    %179 = vmatprep.subr.mxu0 0.0
    %180 = vmatpush1.msra.mxu0 %v143
    %181 = vmatprep.subr.mxu0 0.0
    %182 = vmatpush1.msra.mxu0 0.0
    %183 = vmatprep.subr.mxu0 0.0
    %184 = vmatpush1.msra.mxu0 0.0
    %185 = vmatprep.subr.mxu0 0.0
    %186 = vmatpush1.msra.mxu0 0.0
    %187 = vmatprep.subr.mxu0 0.0
    %188 = vmatpush1.msra.mxu0 0.0
    %189 = vmatprep.subr.mxu0 0.0
    %190 = vmatpush1.msra.mxu0 0.0
    %191 = vmatprep.subr.mxu0 0.0
    %192 = vmatpush1.msra.mxu0 0.0
    %193 = vmatprep.subr.mxu0 0.0
    %194 = vmatpush1.msra.mxu0 0.0
    %195 = vmatprep.subr.mxu0 0.0
    %196 = vmatpush1.msra.mxu0 0.0
    %197 = vmatprep.subr.mxu0 0.0
    %198 = vmatpush1.msra.mxu0 0.0
    %199 = vmatprep.subr.mxu0 0.0
    %200 = vmatpush1.msra.mxu0 0.0
    %201 = vmatprep.subr.mxu0 0.0
    %202 = vmatpush1.msra.mxu0 0.0
    %203 = vmatprep.subr.mxu0 0.0
    %204 = vmatpush1.msra.mxu0 0.0
    %205 = vmatprep.subr.mxu0 0.0
    %206 = vmatpush1.msra.mxu0 0.0
    %207 = vmatprep.subr.mxu0 0.0
    %208 = vmatpush1.msra.mxu0 0.0
    %209 = vmatprep.subr.mxu0 0.0
    %210 = vmatpush1.msra.mxu0 0.0
    %211 = vmatprep.subr.mxu0 0.0
    %212 = vmatpush1.msra.mxu0 0.0
    %213 = vmatprep.mubr.f32.mxu0 0.0
    %214 = vmatmul.mubr.f32.gmra.mrb[0].mxu0 %v127
    %v215 = vpop.f32.mrb[0].mxu0
    %v216 = vadd.f32 %v148, %v215
    %v217 = vpop.f32.mrb[0].mxu0
    %218 = vdwg.mxu0
    %v219 = vmul.f32 %v216, 0.01
    %v220 = vmax.f32 %v216, %v219
    %v221 = vld [vmem:[#allocation4 + $0xa0] sm:$0xff]
    %v222 = vld [vmem:[#allocation4 + $0xa8] sm:$0xff]
    %v223 = vld [vmem:[#allocation4 + $0xb0] sm:$0xff]
    %v224 = vld [vmem:[#allocation4 + $0xb8] sm:$0xff]
    %v225 = vld [vmem:[#allocation4 + $0xc0] sm:$0xff]
    %v226 = vld [vmem:[#allocation4 + $0xc8] sm:$0xff]
    %v227 = vld [vmem:[#allocation4 + $0xd0] sm:$0xff]
    %v228 = vld [vmem:[#allocation4 + $0xd8] sm:$0xff]
    %v229 = vld [vmem:[#allocation4 + $0xe0] sm:$0xff]
    %v230 = vld [vmem:[#allocation4 + $0xe8] sm:$0xff]
    %v231 = vld [vmem:[#allocation4 + $0xf0] sm:$0xff]
    %v232 = vld [vmem:[#allocation4 + $0xf8] sm:$0xff]
    %v233 = vld [vmem:[#allocation4 + $0x100] sm:$0xff]
    %v234 = vld [vmem:[#allocation4 + $0x108] sm:$0xff]
    %v235 = vld [vmem:[#allocation4 + $0x110] sm:$0xff]
    %v236 = vld [vmem:[#allocation4 + $0x118] sm:$0xff]
    %v237 = vld [vmem:[%s2 + $0x2] sm:$0x1]
    %v238 = vlaneseq
    %v239 = vshrl.u32 %v238, 7
    %v240 = vsub.s32 0, %v239
    %v241 = vrot.slane %v237, %v240
    %242 = vmatprep.subr.mxu0 0.0
    %243 = vmatpush1.msra.mxu0 %v221
    %244 = vmatprep.subr.mxu0 0.0
    %245 = vmatpush1.msra.mxu0 %v222
    %246 = vmatprep.subr.mxu0 0.0
    %247 = vmatpush1.msra.mxu0 %v223
    %248 = vmatprep.subr.mxu0 0.0
    %249 = vmatpush1.msra.mxu0 %v224
    %250 = vmatprep.subr.mxu0 0.0
    %251 = vmatpush1.msra.mxu0 %v225
    %252 = vmatprep.subr.mxu0 0.0
    %253 = vmatpush1.msra.mxu0 %v226
    %254 = vmatprep.subr.mxu0 0.0
    %255 = vmatpush1.msra.mxu0 %v227
    %256 = vmatprep.subr.mxu0 0.0
    %257 = vmatpush1.msra.mxu0 %v228
    %258 = vmatprep.subr.mxu0 0.0
    %259 = vmatpush1.msra.mxu0 %v229
    %260 = vmatprep.subr.mxu0 0.0
    %261 = vmatpush1.msra.mxu0 %v230
    %262 = vmatprep.subr.mxu0 0.0
    %263 = vmatpush1.msra.mxu0 %v231
    %264 = vmatprep.subr.mxu0 0.0
    %265 = vmatpush1.msra.mxu0 %v232
    %266 = vmatprep.subr.mxu0 0.0
    %267 = vmatpush1.msra.mxu0 %v233
    %268 = vmatprep.subr.mxu0 0.0
    %269 = vmatpush1.msra.mxu0 %v234
    %270 = vmatprep.subr.mxu0 0.0
    %271 = vmatpush1.msra.mxu0 %v235
    %272 = vmatprep.subr.mxu0 0.0
    %273 = vmatpush1.msra.mxu0 %v236
    %274 = vmatprep.subr.mxu0 0.0
    %275 = vmatpush1.msra.mxu0 0.0
    %276 = vmatprep.subr.mxu0 0.0
    %277 = vmatpush1.msra.mxu0 0.0
    %278 = vmatprep.subr.mxu0 0.0
    %279 = vmatpush1.msra.mxu0 0.0
    %280 = vmatprep.subr.mxu0 0.0
    %281 = vmatpush1.msra.mxu0 0.0
    %282 = vmatprep.subr.mxu0 0.0
    %283 = vmatpush1.msra.mxu0 0.0
    %284 = vmatprep.subr.mxu0 0.0
    %285 = vmatpush1.msra.mxu0 0.0
    %286 = vmatprep.subr.mxu0 0.0
    %287 = vmatpush1.msra.mxu0 0.0
    %288 = vmatprep.subr.mxu0 0.0
    %289 = vmatpush1.msra.mxu0 0.0
    %290 = vmatprep.subr.mxu0 0.0
    %291 = vmatpush1.msra.mxu0 0.0
    %292 = vmatprep.subr.mxu0 0.0
    %293 = vmatpush1.msra.mxu0 0.0
    %294 = vmatprep.subr.mxu0 0.0
    %295 = vmatpush1.msra.mxu0 0.0
    %296 = vmatprep.subr.mxu0 0.0
    %297 = vmatpush1.msra.mxu0 0.0
    %298 = vmatprep.subr.mxu0 0.0
    %299 = vmatpush1.msra.mxu0 0.0
    %300 = vmatprep.subr.mxu0 0.0
    %301 = vmatpush1.msra.mxu0 0.0
    %302 = vmatprep.subr.mxu0 0.0
    %303 = vmatpush1.msra.mxu0 0.0
    %304 = vmatprep.subr.mxu0 0.0
    %305 = vmatpush1.msra.mxu0 0.0
    %306 = vmatprep.mubr.f32.mxu0 0.0
    %307 = vmatmul.mubr.f32.gmra.mrb[0].mxu0 %v220
    %v308 = vpop.f32.mrb[0].mxu0
    %v309 = vadd.f32 %v241, %v308
    %v310 = vpop.f32.mrb[0].mxu0
    %311 = vdwg.mxu0
    %v312 = vlaneseq
    %v313 = vand.u32 %v312, 127
    %vm314 = vcmp.lt.s32.totalorder %v313, 4
    %v315 = vsel %vm314, %v309, -1e+30
    %316 = vmax.xlane.f32.xlu0 %v315
    %v317 = vpop.xlane.xlu0 %316
    %v318 = vsub.f32 %v315, %v317
    %v319 = vmul.f32 %v318, 1.442695
    %v320 = vpow.pop %v319
    %v321 = vsel %vm314, %v320, 0.0
    %322 = vadd.xlane.f32.xlu0 %v321
    %v323 = vpop.xlane.xlu0 %322
    %v324 = vrcp.pop %v323
    %v325 = vmul.f32 %v321, %v324
    %vm326 = vcmask 31744
    %327 = vst.msk [vmem:[%s3] sm:$0xff] %vm326, %v325
    %329 = vrot.lane.b32.xlu0 %v309, 124
    %v330 = vpop.permute.xlu0 %329
    %vm332 = vcmask 7168
    %333 = vst.msk [vmem:[%s4] sm:$0xff] %vm332, %v330
    // Predicated region
    $region22: #{tpu_custom_call.1} parent=1 // pred_check
      _
    $region23: #{tpu_custom_call.1} parent=1 // pred_check_branch
      %335 = sbr.rel (0) target = $region25
    $region24: #{tpu_custom_call.1} parent=1 // pred_region
      _
    $region25: #{tpu_custom_call.1} parent=1 // pred_fallthru
      _
    // Predicated region
    $region26: #{tpu_custom_call.1} parent=1 // pred_check
      _
    $region27: #{tpu_custom_call.1} parent=1 // pred_check_branch
      %337 = sbr.rel (0) target = $region29
    $region28: #{tpu_custom_call.1} parent=1 // pred_region
      _
    $region29: #{tpu_custom_call.1} parent=1 // pred_fallthru
      _
    // Predicated region
    $region30: #{tpu_custom_call.1} parent=1 // pred_check
      _
    $region31: #{tpu_custom_call.1} parent=1 // pred_check_branch
      %339 = sbr.rel (0) target = $region33
    $region32: #{tpu_custom_call.1} parent=1 // pred_region
      _
    $region33: #{tpu_custom_call.1} parent=1 // pred_fallthru
      _
    // Predicated region
    $region34: #{tpu_custom_call.1} parent=1 // pred_check
      _
    $region35: #{tpu_custom_call.1} parent=1 // pred_check_branch
      %341 = sbr.rel (0) target = $region37
    $region36: #{tpu_custom_call.1} parent=1 // pred_region
      _
    $region37: #{tpu_custom_call.1} parent=1 // pred_fallthru
      _
    %342 = vsyncpa [#allocation3], 1
    %343 = vsyncpa [#allocation5], 1

</llo_original>
